<compile_context>
chip_gen: v5e
topology: v5e:2x2
jax: 0.10.0
libtpu: 0.0.40
codegen_flags: <defaults>
</compile_context>

<pallas_src>
import functools

import jax
import jax.numpy as jnp
from jax.experimental import pallas as pl
from jax.experimental.pallas import tpu as pltpu

_BN_EPS = 1e-5
_LANE = 128
EXPANSION = 4


# --------------------------------------------------------------------------
# small helpers
# --------------------------------------------------------------------------
def _round_up(x, m):
    return ((x + m - 1) // m) * m


def _pad2d(a, rows, cols):
    r, c = a.shape
    if r == rows and c == cols:
        return a
    return jnp.pad(a, ((0, rows - r), (0, cols - c)))


def _pad_row(v, n):
    v = v.astype(jnp.float32)
    if v.shape[0] != n:
        v = jnp.pad(v, (0, n - v.shape[0]))
    return v.reshape(1, n)


def _choose_m_tiling(m, block_m):
    """Pad M up and pick the tile size (multiple of 16 for bf16 sublanes)."""
    if m <= block_m:
        mp = _round_up(m, 16)
        return mp, mp
    return _round_up(m, block_m), block_m


@functools.lru_cache(maxsize=None)
def _vmem_limit_bytes():
    """Generation-dependent scoped-VMEM limit (~75% of physical, <=100 MiB)."""
    try:
        cap = int(pltpu.get_tpu_info().vmem_capacity_bytes)
    except Exception:
        cap = 64 * 1024 * 1024
    return int(min(cap * 3 // 4, 100 * 1024 * 1024))


def _default_block_m():
    # 1024 on v5e/v6e (big VMEM), 512 on v7x (64 MiB VMEM).
    return 1024 if _vmem_limit_bytes() >= 64 * 1024 * 1024 else 512


def _compiler_params(semantics):
    return pltpu.CompilerParams(dimension_semantics=semantics,
                                vmem_limit_bytes=_vmem_limit_bytes())


def _cost(flops, bytes_accessed, transcendentals=0):
    try:
        return pl.CostEstimate(flops=int(flops),
                               transcendentals=int(transcendentals),
                               bytes_accessed=int(bytes_accessed))
    except Exception:
        return None


def _fold_bn(sum_acc, sq_acc, g_ref, b_ref, sb_ref, inv_m, eps):
    """Fold batch stats into (scale, bias); write the (2, C) sb output."""
    mean = sum_acc[...] * inv_m
    var = jnp.maximum(sq_acc[...] * inv_m - mean * mean, 0.0)
    # TODO(synk): E[y^2]-E[y]^2 can lose precision for huge M; consider a
    # centered second moment if needed.
    scale = g_ref[...] * jax.lax.rsqrt(var + eps)       # EUP rsqrt, f32
    bias = b_ref[...] - mean * scale
    sb_ref[0:1, :] = scale
    sb_ref[1:2, :] = bias


# --------------------------------------------------------------------------
# Pallas kernels
# --------------------------------------------------------------------------
def _matmul_stats_kernel(x_ref, w_ref, g_ref, b_ref, y_ref, sb_ref,
                         sum_acc, sq_acc, *, inv_m, eps):
    """Y = X @ W emitted per tile (bf16) + per-channel BN stats accumulated
    across the M grid; folded (scale, bias) written on the last tile.
    Caller guarantees padded rows of X are zero, so no row mask is needed."""
    i = pl.program_id(0)

    @pl.when(i == 0)
    def _init():
        sum_acc[...] = jnp.zeros_like(sum_acc)
        sq_acc[...] = jnp.zeros_like(sq_acc)

    y = jnp.dot(x_ref[...], w_ref[...], preferred_element_type=jnp.float32)
    sum_acc[...] += jnp.sum(y, axis=0, keepdims=True)
    sq_acc[...] += jnp.sum(y * y, axis=0, keepdims=True)
    y_ref[...] = y.astype(y_ref.dtype)

    @pl.when(i == pl.num_programs(0) - 1)
    def _finalize():
        _fold_bn(sum_acc, sq_acc, g_ref, b_ref, sb_ref, inv_m, eps)


def _affine_matmul_stats_kernel(yp_ref, sbp_ref, w_ref, g_ref, b_ref,
                                y_ref, sb_ref, sum_acc, sq_acc,
                                *, inv_m, eps, m_total):
    """Fused: BN-affine+ReLU of the previous stage's Y, then matmul with W,
    accumulate this stage's BN stats and emit Y.  The post-affine activation
    is never written to HBM."""
    i = pl.program_id(0)

    @pl.when(i == 0)
    def _init():
        sum_acc[...] = jnp.zeros_like(sum_acc)
        sq_acc[...] = jnp.zeros_like(sq_acc)

    x = yp_ref[...].astype(jnp.float32) * sbp_ref[0:1, :] + sbp_ref[1:2, :]
    x = jnp.maximum(x, 0.0)
    if m_total is not None:
        # Padded rows of yp are zero, but affine+ReLU makes them relu(bias);
        # mask them so this stage's batch statistics stay exact.
        bm = yp_ref.shape[0]
        rows = i * bm + jax.lax.broadcasted_iota(jnp.int32, (bm, 1), 0)
        x = jnp.where(rows < m_total, x, 0.0)

    y = jnp.dot(x.astype(jnp.bfloat16), w_ref[...],
                preferred_element_type=jnp.float32)
    sum_acc[...] += jnp.sum(y, axis=0, keepdims=True)
    sq_acc[...] += jnp.sum(y * y, axis=0, keepdims=True)
    y_ref[...] = y.astype(y_ref.dtype)

    @pl.when(i == pl.num_programs(0) - 1)
    def _finalize():
        _fold_bn(sum_acc, sq_acc, g_ref, b_ref, sb_ref, inv_m, eps)


def _conv3x3_stats_kernel(x_ref, w_ref, g_ref, b_ref, y_ref, sb_ref,
                          sum_acc, sq_acc, *, stride, ho, wo, inv_m, eps):
    """Fused 3x3 conv (pad=1): per-image halo'd slab in VMEM, 9 shifted
    matmuls accumulated in f32, BN stats across the image grid, Y emitted."""
    b = pl.program_id(0)

    @pl.when(b == 0)
    def _init():
        sum_acc[...] = jnp.zeros_like(sum_acc)
        sq_acc[...] = jnp.zeros_like(sq_acc)

    c_in = x_ref.shape[-1]
    c_out = w_ref.shape[-1]
    acc = jnp.zeros((ho * wo, c_out), jnp.float32)
    for dy in range(3):
        if stride == 1:
            rows = x_ref[pl.ds(dy, ho), :, :]                  # (ho, W+2, C)
        else:
            rows = x_ref[pl.ds(dy, ho, stride), :, :]
        for dx in range(3):
            if stride == 1:
                patch = rows[:, dx:dx + wo, :]
            else:
                # (untraced for now: wrapper falls back to im2col for stride>1)
                patch = jax.lax.slice(
                    rows, (0, dx, 0),
                    (ho, dx + stride * (wo - 1) + 1, c_in), (1, stride, 1))
            patch2d = patch.reshape(ho * wo, c_in)
            wt = w_ref[pl.ds((dy * 3 + dx) * c_in, c_in), :]   # (C, C_out)
            acc = acc + jnp.dot(patch2d, wt,
                                preferred_element_type=jnp.float32)

    sum_acc[...] += jnp.sum(acc, axis=0, keepdims=True)
    sq_acc[...] += jnp.sum(acc * acc, axis=0, keepdims=True)
    y_ref[...] = acc.astype(y_ref.dtype)

    @pl.when(b == pl.num_programs(0) - 1)
    def _finalize():
        _fold_bn(sum_acc, sq_acc, g_ref, b_ref, sb_ref, inv_m, eps)


def _affine_kernel(y_ref, sb_ref, o_ref, *, relu):
    out = y_ref[...].astype(jnp.float32) * sb_ref[0:1, :] + sb_ref[1:2, :]
    if relu:
        out = jnp.maximum(out, 0.0)
    o_ref[...] = out.astype(o_ref.dtype)


def _affine_res_kernel(y_ref, sb_ref, r_ref, o_ref, *, relu):
    out = (y_ref[...].astype(jnp.float32) * sb_ref[0:1, :] + sb_ref[1:2, :]
           + r_ref[...].astype(jnp.float32))
    if relu:
        out = jnp.maximum(out, 0.0)
    o_ref[...] = out.astype(o_ref.dtype)


def _affine_dual_kernel(y1_ref, sb1_ref, y2_ref, sb2_ref, o_ref, *, relu):
    o1 = y1_ref[...].astype(jnp.float32) * sb1_ref[0:1, :] + sb1_ref[1:2, :]
    o2 = y2_ref[...].astype(jnp.float32) * sb2_ref[0:1, :] + sb2_ref[1:2, :]
    out = o1 + o2
    if relu:
        out = jnp.maximum(out, 0.0)
    o_ref[...] = out.astype(o_ref.dtype)


# --------------------------------------------------------------------------
# pallas_call wrappers
# --------------------------------------------------------------------------
def _matmul_stats(x2d, w2d, g_row, b_row, m_true, *, block_m, eps=_BN_EPS):
    """Returns (Y[bf16], sb[2, N]) for Y = X @ W with BN stats over m_true rows."""
    mp, k = x2d.shape
    n = w2d.shape[1]
    kernel = functools.partial(_matmul_stats_kernel,
                               inv_m=1.0 / float(m_true), eps=eps)
    flops = 2 * mp * k * n + 6 * mp * n
    byts = mp * k * 2 + k * n * 2 + mp * n * 2 + 4 * n * 4
    return pl.pallas_call(
        kernel,
        out_shape=(jax.ShapeDtypeStruct((mp, n), jnp.bfloat16),
                   jax.ShapeDtypeStruct((2, n), jnp.float32)),
        grid_spec=pltpu.PrefetchScalarGridSpec(
            num_scalar_prefetch=0,
            grid=(mp // block_m,),
            in_specs=[
                pl.BlockSpec((block_m, k), lambda i: (i, 0)),
                pl.BlockSpec((k, n), lambda i: (0, 0)),
                pl.BlockSpec((1, n), lambda i: (0, 0)),
                pl.BlockSpec((1, n), lambda i: (0, 0)),
            ],
            out_specs=[
                pl.BlockSpec((block_m, n), lambda i: (i, 0)),
                pl.BlockSpec((2, n), lambda i: (0, 0)),
            ],
            scratch_shapes=[pltpu.VMEM((1, n), jnp.float32),
                            pltpu.VMEM((1, n), jnp.float32)],
        ),
        compiler_params=_compiler_params(("arbitrary",)),
        cost_estimate=_cost(flops, byts, transcendentals=n),
    )(x2d, w2d, g_row, b_row)


def _affine_matmul_stats(yprev, sb_prev, w2d, g_row, b_row, m_true,
                         *, block_m, eps=_BN_EPS):
    """Fused prev-BN-affine+ReLU -> matmul -> this-BN-stats; emits (Y, sb)."""
    mp, k = yprev.shape
    n = w2d.shape[1]
    m_total = m_true if mp != m_true else None
    kernel = functools.partial(_affine_matmul_stats_kernel,
                               inv_m=1.0 / float(m_true), eps=eps,
                               m_total=m_total)
    flops = 2 * mp * k * n + 4 * mp * k + 6 * mp * n
    byts = mp * k * 2 + k * n * 2 + mp * n * 2 + 4 * (k + n) * 4
    return pl.pallas_call(
        kernel,
        out_shape=(jax.ShapeDtypeStruct((mp, n), jnp.bfloat16),
                   jax.ShapeDtypeStruct((2, n), jnp.float32)),
        grid_spec=pltpu.PrefetchScalarGridSpec(
            num_scalar_prefetch=0,
            grid=(mp // block_m,),
            in_specs=[
                pl.BlockSpec((block_m, k), lambda i: (i, 0)),
                pl.BlockSpec((2, k), lambda i: (0, 0)),
                pl.BlockSpec((k, n), lambda i: (0, 0)),
                pl.BlockSpec((1, n), lambda i: (0, 0)),
                pl.BlockSpec((1, n), lambda i: (0, 0)),
            ],
            out_specs=[
                pl.BlockSpec((block_m, n), lambda i: (i, 0)),
                pl.BlockSpec((2, n), lambda i: (0, 0)),
            ],
            scratch_shapes=[pltpu.VMEM((1, n), jnp.float32),
                            pltpu.VMEM((1, n), jnp.float32)],
        ),
        compiler_params=_compiler_params(("arbitrary",)),
        cost_estimate=_cost(flops, byts, transcendentals=n),
    )(yprev, sb_prev, w2d, g_row, b_row)


def _conv3x3_stats(x_sp, w2d, g_row, b_row, *, stride, ho, wo, eps=_BN_EPS):
    """Fused 3x3 conv over spatially padded NHWC input; per-image grid.
    Returns (Y[n, ho*wo, C_out] bf16, sb[2, C_out])."""
    n_img, hp, wp, c = x_sp.shape
    c_out = w2d.shape[1]
    m_true = n_img * ho * wo
    kernel = functools.partial(_conv3x3_stats_kernel, stride=stride,
                               ho=ho, wo=wo, inv_m=1.0 / float(m_true),
                               eps=eps)
    flops = 2 * m_true * 9 * c * c_out
    byts = n_img * hp * wp * c * 2 + 9 * c * c_out * 2 + m_true * c_out * 2
    return pl.pallas_call(
        kernel,
        out_shape=(jax.ShapeDtypeStruct((n_img, ho * wo, c_out), jnp.bfloat16),
                   jax.ShapeDtypeStruct((2, c_out), jnp.float32)),
        grid_spec=pltpu.PrefetchScalarGridSpec(
            num_scalar_prefetch=0,
            grid=(n_img,),
            in_specs=[
                pl.BlockSpec((None, hp, wp, c), lambda i: (i, 0, 0, 0)),
                pl.BlockSpec((9 * c, c_out), lambda i: (0, 0)),
                pl.BlockSpec((1, c_out), lambda i: (0, 0)),
                pl.BlockSpec((1, c_out), lambda i: (0, 0)),
            ],
            out_specs=[
                pl.BlockSpec((None, ho * wo, c_out), lambda i: (i, 0, 0)),
                pl.BlockSpec((2, c_out), lambda i: (0, 0)),
            ],
            scratch_shapes=[pltpu.VMEM((1, c_out), jnp.float32),
                            pltpu.VMEM((1, c_out), jnp.float32)],
        ),
        compiler_params=_compiler_params(("arbitrary",)),
        cost_estimate=_cost(flops, byts, transcendentals=c_out),
    )(x_sp, w2d, g_row, b_row)


def _affine_apply(y2d, sb, *, relu, block_m, residual=None,
                  out_dtype=jnp.bfloat16):
    mp, n = y2d.shape
    in_specs = [pl.BlockSpec((block_m, n), lambda i: (i, 0)),
                pl.BlockSpec((2, n), lambda i: (0, 0))]
    args = [y2d, sb]
    byts = mp * n * (2 + jnp.dtype(out_dtype).itemsize)
    if residual is None:
        kernel = functools.partial(_affine_kernel, relu=relu)
    else:
        in_specs.append(pl.BlockSpec((block_m, n), lambda i: (i, 0)))
        args.append(residual)
        byts += mp * n * residual.dtype.itemsize
        kernel = functools.partial(_affine_res_kernel, relu=relu)
    return pl.pallas_call(
        kernel,
        out_shape=jax.ShapeDtypeStruct((mp, n), out_dtype),
        grid_spec=pltpu.PrefetchScalarGridSpec(
            num_scalar_prefetch=0,
            grid=(mp // block_m,),
            in_specs=in_specs,
            out_specs=pl.BlockSpec((block_m, n), lambda i: (i, 0)),
        ),
        compiler_params=_compiler_params(("parallel",)),
        cost_estimate=_cost(4 * mp * n, byts),
    )(*args)


def _affine_dual(y1, sb1, y2, sb2, *, relu, block_m, out_dtype=jnp.float32):
    mp, n = y1.shape
    kernel = functools.partial(_affine_dual_kernel, relu=relu)
    byts = mp * n * (2 + 2 + jnp.dtype(out_dtype).itemsize)
    return pl.pallas_call(
        kernel,
        out_shape=jax.ShapeDtypeStruct((mp, n), out_dtype),
        grid_spec=pltpu.PrefetchScalarGridSpec(
            num_scalar_prefetch=0,
            grid=(mp // block_m,),
            in_specs=[
                pl.BlockSpec((block_m, n), lambda i: (i, 0)),
                pl.BlockSpec((2, n), lambda i: (0, 0)),
                pl.BlockSpec((block_m, n), lambda i: (i, 0)),
                pl.BlockSpec((2, n), lambda i: (0, 0)),
            ],
            out_specs=pl.BlockSpec((block_m, n), lambda i: (i, 0)),
        ),
        compiler_params=_compiler_params(("parallel",)),
        cost_estimate=_cost(7 * mp * n, byts),
    )(y1, sb1, y2, sb2)


# --------------------------------------------------------------------------
# im2col fallback for the strided 3x3 conv (wrapper-level, bf16).
# --------------------------------------------------------------------------
def _im2col_3x3(x_nhwc, stride):
    n, h, w, c = x_nhwc.shape
    xp = jnp.pad(x_nhwc, ((0, 0), (1, 1), (1, 1), (0, 0)))
    ho = (h + 2 - 3) // stride + 1
    wo = (w + 2 - 3) // stride + 1
    cols = []
    for dy in range(3):
        for dx in range(3):
            patch = xp[:, dy:dy + stride * (ho - 1) + 1:stride,
                       dx:dx + stride * (wo - 1) + 1:stride, :]
            cols.append(patch)
    col = jnp.stack(cols, axis=3)                      # [N, Ho, Wo, 9, C]
    return col.reshape(n * ho * wo, 9 * c), ho, wo


# --------------------------------------------------------------------------
# Bottleneck module (parameters + forward)
# --------------------------------------------------------------------------
def init_bottleneck_params(key, in_planes, planes, stride=1):
    ks = jax.random.split(key, 8)
    exp_planes = EXPANSION * planes
    p = {
        "conv1_w": 0.1 * jax.random.normal(ks[0], (planes, in_planes, 1, 1), jnp.float32),
        "bn1_g": 1.0 + 0.05 * jax.random.normal(ks[1], (planes,), jnp.float32),
        "bn1_b": 0.05 * jax.random.normal(ks[2], (planes,), jnp.float32),
        "conv2_w": 0.1 * jax.random.normal(ks[3], (planes, planes, 3, 3), jnp.float32),
        "bn2_g": jnp.ones((planes,), jnp.float32),
        "bn2_b": jnp.zeros((planes,), jnp.float32),
        "conv3_w": 0.1 * jax.random.normal(ks[4], (exp_planes, planes, 1, 1), jnp.float32),
        "bn3_g": jnp.ones((exp_planes,), jnp.float32),
        "bn3_b": jnp.zeros((exp_planes,), jnp.float32),
    }
    if stride != 1 or in_planes != exp_planes:
        p["sc_w"] = 0.1 * jax.random.normal(ks[5], (exp_planes, in_planes, 1, 1), jnp.float32)
        p["sc_g"] = jnp.ones((exp_planes,), jnp.float32)
        p["sc_b"] = jnp.zeros((exp_planes,), jnp.float32)
    return p


def bottleneck_forward_nhwc(x_nhwc, params, stride=1, block_m=None):
    """NHWC-native forward (use this to chain blocks without layout flips)."""
    if block_m is None:
        block_m = _default_block_m()
    n, h, w, cin = x_nhwc.shape
    planes = params["conv1_w"].shape[0]
    exp_planes = EXPANSION * planes

    cin_p = _round_up(cin, _LANE)
    cpl_p = _round_up(planes, _LANE)
    cex_p = _round_up(exp_planes, _LANE)

    # ---- conv1 (1x1) + bn1 + relu ---------------------------------------
    m1 = n * h * w
    m1p, bm1 = _choose_m_tiling(m1, block_m)
    x2d = _pad2d(x_nhwc.reshape(m1, cin).astype(jnp.bfloat16), m1p, cin_p)
    w1 = _pad2d(params["conv1_w"].reshape(planes, cin).T.astype(jnp.bfloat16),
                cin_p, cpl_p)
    g1 = _pad_row(params["bn1_g"], cpl_p)
    b1 = _pad_row(params["bn1_b"], cpl_p)
    y1, sb1 = _matmul_stats(x2d, w1, g1, b1, m1, block_m=bm1)
    out1 = _affine_apply(y1, sb1, relu=True, block_m=bm1,
                         out_dtype=jnp.bfloat16)                # [m1p, cpl_p]

    # ---- conv2 (3x3, stride, pad=1): Y2 + BN2 stats ----------------------
    w2 = jnp.transpose(params["conv2_w"], (2, 3, 1, 0))          # [3,3,in,out]
    w2 = jnp.pad(w2, ((0, 0), (0, 0),
                      (0, cpl_p - planes), (0, cpl_p - planes)))
    w2 = w2.reshape(9 * cpl_p, cpl_p).astype(jnp.bfloat16)
    g2 = _pad_row(params["bn2_g"], cpl_p)
    b2 = _pad_row(params["bn2_b"], cpl_p)

    ho = (h - 1) // stride + 1
    wo = (w - 1) // stride + 1
    m2 = n * ho * wo
    m2p, bm2 = _choose_m_tiling(m2, block_m)
    out1_nhwc = out1[:m1].reshape(n, h, w, cpl_p)

    if stride == 1:
        # Fused halo'd 3x3 conv kernel: no im2col tensor in HBM.
        x_sp = jnp.pad(out1_nhwc, ((0, 0), (1, 1), (1, 1), (0, 0)))
        y2_img, sb2 = _conv3x3_stats(x_sp, w2, g2, b2,
                                     stride=stride, ho=ho, wo=wo)
        y2 = _pad2d(y2_img.reshape(m2, cpl_p), m2p, cpl_p)       # zero pad rows
    else:
        # TODO(synk): extend the fused halo kernel to stride>1 and drop this.
        col, _, _ = _im2col_3x3(out1_nhwc, stride)
        col = _pad2d(col, m2p, 9 * cpl_p)
        y2, sb2 = _matmul_stats(col, w2, g2, b2, m2, block_m=bm2)

    # ---- bn2-affine + relu + conv3 (1x1) + bn3 stats, fused --------------
    w3 = _pad2d(params["conv3_w"].reshape(exp_planes, planes).T
                .astype(jnp.bfloat16), cpl_p, cex_p)
    g3 = _pad_row(params["bn3_g"], cex_p)
    b3 = _pad_row(params["bn3_b"], cex_p)
    y3, sb3 = _affine_matmul_stats(y2, sb2, w3, g3, b3, m2, block_m=bm2)

    # ---- shortcut + final affine + residual add + relu -------------------
    if "sc_w" in params:
        xs = x_nhwc[:, ::stride, ::stride, :]
        xs2d = _pad2d(xs.reshape(m2, cin).astype(jnp.bfloat16), m2p, cin_p)
        wsc = _pad2d(params["sc_w"].reshape(exp_planes, cin).T
                     .astype(jnp.bfloat16), cin_p, cex_p)
        gsc = _pad_row(params["sc_g"], cex_p)
        bsc = _pad_row(params["sc_b"], cex_p)
        ysc, sbsc = _matmul_stats(xs2d, wsc, gsc, bsc, m2, block_m=bm2)
        out3 = _affine_dual(y3, sb3, ysc, sbsc, relu=True, block_m=bm2,
                            out_dtype=jnp.float32)
    else:
        # Identity shortcut: bf16 residual stream (kernel upcasts to f32).
        res = _pad2d(x_nhwc.reshape(m1, cin).astype(jnp.bfloat16), m2p, cex_p)
        out3 = _affine_apply(y3, sb3, relu=True, block_m=bm2,
                             residual=res, out_dtype=jnp.float32)

    return out3[:m2, :exp_planes].reshape(n, ho, wo, exp_planes)


def bottleneck_forward(x_nchw, params, stride=1, block_m=None):
    """Forward pass matching PyTorch Bottleneck (training-mode BatchNorm).
    NCHW in / NCHW out; prefer bottleneck_forward_nhwc when chaining blocks."""
    x = jnp.transpose(x_nchw, (0, 2, 3, 1))                      # NCHW -> NHWC
    out = bottleneck_forward_nhwc(x, params, stride=stride, block_m=block_m)
    return jnp.transpose(out, (0, 3, 1, 2))                      # NHWC -> NCHW


# --------------------------------------------------------------------------
if __name__ == "__main__":
    key = jax.random.PRNGKey(0)
    k_x, k_p = jax.random.split(key)

    # Case A: projection shortcut (in_planes != 4*planes), stride=1
    #         -> exercises fused 3x3 path + dual-affine final kernel.
    in_planes, planes, stride = 4, 4, 1
    x = jax.random.normal(k_x, (2, in_planes, 16, 16), jnp.float32)   # NCHW
    params = init_bottleneck_params(k_p, in_planes, planes, stride)
    y = jax.block_until_ready(bottleneck_forward(x, params, stride=stride))
    assert y.shape == (2, EXPANSION * planes, 16, 16), y.shape
    assert bool(jnp.all(jnp.isfinite(y)))
    assert bool(jnp.all(y >= 0.0))            # final ReLU

    # Case B: identity shortcut (in_planes == 4*planes, stride=1)
    #         -> exercises the bf16 residual apply kernel.
    k_x2, k_p2 = jax.random.split(k_p)
    x2 = jax.random.normal(k_x2, (2, 16, 8, 8), jnp.float32)
    params2 = init_bottleneck_params(k_p2, 16, 4, 1)
    y2 = jax.block_until_ready(bottleneck_forward(x2, params2, stride=1))
    assert y2.shape == (2, 16, 8, 8), y2.shape
    assert bool(jnp.all(jnp.isfinite(y2))) and bool(jnp.all(y2 >= 0.0))

    # Case C: strided projection shortcut (stride=2)
    #         -> exercises the im2col fallback path.
    k_x3, k_p3 = jax.random.split(k_p2)
    x3 = jax.random.normal(k_x3, (2, 8, 16, 16), jnp.float32)
    params3 = init_bottleneck_params(k_p3, 8, 4, 2)
    y3 = jax.block_until_ready(bottleneck_forward(x3, params3, stride=2))
    assert y3.shape == (2, 16, 8, 8), y3.shape
    assert bool(jnp.all(jnp.isfinite(y3))) and bool(jnp.all(y3 >= 0.0))

    print("KERNEL_OK")
</pallas_src>

<mosaic_0001>
module attributes {stable_mosaic.version = 11 : i64} {
  func.func @_matmul_stats_kernel(%arg0: i32, %arg1: memref<512x128xbf16, #tpu.memory_space<vmem>>, %arg2: memref<128x128xbf16, #tpu.memory_space<vmem>>, %arg3: memref<1x128xf32, #tpu.memory_space<vmem>>, %arg4: memref<1x128xf32, #tpu.memory_space<vmem>>, %arg5: memref<512x128xbf16, #tpu.memory_space<vmem>>, %arg6: memref<2x128xf32, #tpu.memory_space<vmem>>, %arg7: memref<1x128xf32, #tpu.memory_space<vmem>>, %arg8: memref<1x128xf32, #tpu.memory_space<vmem>>) attributes {dimension_semantics = [#tpu.dimension_semantics<arbitrary>], iteration_bounds = array<i64: 1>, scalar_prefetch = 0 : i64, scratch_operands = 2 : i64, tpu.core_type = #tpu.core_type<tc>, window_params = [{transform_indices = @transform_0, window_bounds = array<i64: 512, 128>}, {pipeline_mode = #tpu.pipeline_mode<synchronous>, transform_indices = @transform_1, window_bounds = array<i64: 128, 128>}, {pipeline_mode = #tpu.pipeline_mode<synchronous>, transform_indices = @transform_2, window_bounds = array<i64: 1, 128>}, {pipeline_mode = #tpu.pipeline_mode<synchronous>, transform_indices = @transform_3, window_bounds = array<i64: 1, 128>}, {transform_indices = @transform_4, window_bounds = array<i64: 512, 128>}, {pipeline_mode = #tpu.pipeline_mode<synchronous>, transform_indices = @transform_5, window_bounds = array<i64: 2, 128>}]} {
    %c0_i32 = arith.constant 0 : i32
    %0 = arith.cmpi eq, %arg0, %c0_i32 : i32
    %1 = arith.extui %0 : i1 to i32
    %c0_i32_0 = arith.constant 0 : i32
    %2 = arith.cmpi ne, %1, %c0_i32_0 : i32
    scf.if %2 {
      %cst_18 = arith.constant 0.000000e+00 : f32
      %22 = vector.broadcast %cst_18 : f32 to vector<1x128xf32>
      %c0_19 = arith.constant 0 : index
      %c0_20 = arith.constant 0 : index
      %23 = vector.load %arg7[%c0_19, %c0_20] : memref<1x128xf32, #tpu.memory_space<vmem>>, vector<1x128xf32>
      tpu.vector_store %arg7[%c0_19, %c0_20], %22 {strides = array<i32>} : memref<1x128xf32, #tpu.memory_space<vmem>>, vector<1x128xf32>,
      %cst_21 = arith.constant 0.000000e+00 : f32
      %24 = vector.broadcast %cst_21 : f32 to vector<1x128xf32>
      %c0_22 = arith.constant 0 : index
      %c0_23 = arith.constant 0 : index
      %25 = vector.load %arg8[%c0_22, %c0_23] : memref<1x128xf32, #tpu.memory_space<vmem>>, vector<1x128xf32>
      tpu.vector_store %arg8[%c0_22, %c0_23], %24 {strides = array<i32>} : memref<1x128xf32, #tpu.memory_space<vmem>>, vector<1x128xf32>,
    } else {
    }
    %c0 = arith.constant 0 : index
    %c0_1 = arith.constant 0 : index
    %3 = vector.load %arg1[%c0, %c0_1] : memref<512x128xbf16, #tpu.memory_space<vmem>>, vector<512x128xbf16>
    %c0_2 = arith.constant 0 : index
    %c0_3 = arith.constant 0 : index
    %4 = vector.load %arg2[%c0_2, %c0_3] : memref<128x128xbf16, #tpu.memory_space<vmem>>, vector<128x128xbf16>
    %cst = arith.constant dense<0.000000e+00> : vector<512x128xf32>
    %5 = tpu.matmul %3, %4, %cst {dimension_numbers = #tpu.dot_dimension_numbers<[1], [0], [0], [1], [0, 0, 1, 1], [], []>} : vector<512x128xbf16>, vector<128x128xbf16>, vector<512x128xf32> -> vector<512x128xf32>
    %c0_4 = arith.constant 0 : index
    %c0_5 = arith.constant 0 : index
    %6 = vector.load %arg7[%c0_4, %c0_5] : memref<1x128xf32, #tpu.memory_space<vmem>>, vector<1x128xf32>
    %cst_6 = arith.constant dense<0.000000e+00> : vector<128xf32>
    %7 = vector.multi_reduction <add>, %5, %cst_6 [0] : vector<512x128xf32> to vector<128xf32>
    %8 = vector.shape_cast %7 : vector<128xf32> to vector<1x128xf32>
    %9 = arith.addf %6, %8 : vector<1x128xf32>
    %c0_7 = arith.constant 0 : index
    %c0_8 = arith.constant 0 : index
    %10 = vector.load %arg7[%c0_7, %c0_8] : memref<1x128xf32, #tpu.memory_space<vmem>>, vector<1x128xf32>
    tpu.vector_store %arg7[%c0_7, %c0_8], %9 {strides = array<i32>} : memref<1x128xf32, #tpu.memory_space<vmem>>, vector<1x128xf32>,
    %c0_9 = arith.constant 0 : index
    %c0_10 = arith.constant 0 : index
    %11 = vector.load %arg8[%c0_9, %c0_10] : memref<1x128xf32, #tpu.memory_space<vmem>>, vector<1x128xf32>
    %12 = arith.mulf %5, %5 : vector<512x128xf32>
    %cst_11 = arith.constant dense<0.000000e+00> : vector<128xf32>
    %13 = vector.multi_reduction <add>, %12, %cst_11 [0] : vector<512x128xf32> to vector<128xf32>
    %14 = vector.shape_cast %13 : vector<128xf32> to vector<1x128xf32>
    %15 = arith.addf %11, %14 : vector<1x128xf32>
    %c0_12 = arith.constant 0 : index
    %c0_13 = arith.constant 0 : index
    %16 = vector.load %arg8[%c0_12, %c0_13] : memref<1x128xf32, #tpu.memory_space<vmem>>, vector<1x128xf32>
    tpu.vector_store %arg8[%c0_12, %c0_13], %15 {strides = array<i32>} : memref<1x128xf32, #tpu.memory_space<vmem>>, vector<1x128xf32>,
    %17 = arith.truncf %5 : vector<512x128xf32> to vector<512x128xbf16>
    %c0_14 = arith.constant 0 : index
    %c0_15 = arith.constant 0 : index
    %18 = vector.load %arg5[%c0_14, %c0_15] : memref<512x128xbf16, #tpu.memory_space<vmem>>, vector<512x128xbf16>
    tpu.vector_store %arg5[%c0_14, %c0_15], %17 {strides = array<i32>} : memref<512x128xbf16, #tpu.memory_space<vmem>>, vector<512x128xbf16>,
    %c0_i32_16 = arith.constant 0 : i32
    %19 = arith.cmpi eq, %arg0, %c0_i32_16 : i32
    %20 = arith.extui %19 : i1 to i32
    %c0_i32_17 = arith.constant 0 : i32
    %21 = arith.cmpi ne, %20, %c0_i32_17 : i32
    scf.if %21 {
      %c0_18 = arith.constant 0 : index
      %c0_19 = arith.constant 0 : index
      %22 = vector.load %arg7[%c0_18, %c0_19] : memref<1x128xf32, #tpu.memory_space<vmem>>, vector<1x128xf32>
      %cst_20 = arith.constant 0.001953125 : f32
      %23 = vector.broadcast %cst_20 : f32 to vector<1x128xf32>
      %24 = arith.mulf %22, %23 : vector<1x128xf32>
      %c0_21 = arith.constant 0 : index
      %c0_22 = arith.constant 0 : index
      %25 = vector.load %arg8[%c0_21, %c0_22] : memref<1x128xf32, #tpu.memory_space<vmem>>, vector<1x128xf32>
      %cst_23 = arith.constant 0.001953125 : f32
      %26 = vector.broadcast %cst_23 : f32 to vector<1x128xf32>
      %27 = arith.mulf %25, %26 : vector<1x128xf32>
      %28 = arith.mulf %24, %24 : vector<1x128xf32>
      %29 = arith.subf %27, %28 : vector<1x128xf32>
      %cst_24 = arith.constant 0.000000e+00 : f32
      %30 = vector.broadcast %cst_24 : f32 to vector<1x128xf32>
      %31 = arith.maximumf %29, %30 : vector<1x128xf32>
      %c0_25 = arith.constant 0 : index
      %c0_26 = arith.constant 0 : index
      %32 = vector.load %arg3[%c0_25, %c0_26] : memref<1x128xf32, #tpu.memory_space<vmem>>, vector<1x128xf32>
      %cst_27 = arith.constant 9.99999974E-6 : f32
      %33 = vector.broadcast %cst_27 : f32 to vector<1x128xf32>
      %34 = arith.addf %31, %33 : vector<1x128xf32>
      %35 = math.rsqrt %34 : vector<1x128xf32>
      %36 = arith.mulf %32, %35 : vector<1x128xf32>
      %c0_28 = arith.constant 0 : index
      %c0_29 = arith.constant 0 : index
      %37 = vector.load %arg4[%c0_28, %c0_29] : memref<1x128xf32, #tpu.memory_space<vmem>>, vector<1x128xf32>
      %38 = arith.mulf %24, %36 : vector<1x128xf32>
      %39 = arith.subf %37, %38 : vector<1x128xf32>
      %c0_30 = arith.constant 0 : index
      %c0_31 = arith.constant 0 : index
      %40 = vector.load %arg6[%c0_30, %c0_31] : memref<2x128xf32, #tpu.memory_space<vmem>>, vector<1x128xf32>
      tpu.vector_store %arg6[%c0_30, %c0_31], %36 {strides = array<i32>} : memref<2x128xf32, #tpu.memory_space<vmem>>, vector<1x128xf32>,
      %c1 = arith.constant 1 : index
      %c0_32 = arith.constant 0 : index
      %41 = vector.load %arg6[%c1, %c0_32] : memref<2x128xf32, #tpu.memory_space<vmem>>, vector<1x128xf32>
      tpu.vector_store %arg6[%c1, %c0_32], %39 {strides = array<i32>} : memref<2x128xf32, #tpu.memory_space<vmem>>, vector<1x128xf32>,
    } else {
    }
    return
  }
  func.func @transform_0(%arg0: i32) -> (i32, i32) {
    %c0_i32 = arith.constant 0 : i32
    %c0_i32_0 = arith.constant 0 : i32
    return %arg0, %c0_i32 : i32, i32
  }
  func.func @transform_1(%arg0: i32) -> (i32, i32) {
    %c0_i32 = arith.constant 0 : i32
    %c0_i32_0 = arith.constant 0 : i32
    %c0_i32_1 = arith.constant 0 : i32
    return %c0_i32, %c0_i32_0 : i32, i32
  }
  func.func @transform_2(%arg0: i32) -> (i32, i32) {
    %c0_i32 = arith.constant 0 : i32
    %c0_i32_0 = arith.constant 0 : i32
    %c0_i32_1 = arith.constant 0 : i32
    return %c0_i32, %c0_i32_0 : i32, i32
  }
  func.func @transform_3(%arg0: i32) -> (i32, i32) {
    %c0_i32 = arith.constant 0 : i32
    %c0_i32_0 = arith.constant 0 : i32
    %c0_i32_1 = arith.constant 0 : i32
    return %c0_i32, %c0_i32_0 : i32, i32
  }
  func.func @transform_4(%arg0: i32) -> (i32, i32) {
    %c0_i32 = arith.constant 0 : i32
    %c0_i32_0 = arith.constant 0 : i32
    return %arg0, %c0_i32 : i32, i32
  }
  func.func @transform_5(%arg0: i32) -> (i32, i32) {
    %c0_i32 = arith.constant 0 : i32
    %c0_i32_0 = arith.constant 0 : i32
    %c0_i32_1 = arith.constant 0 : i32
    return %c0_i32, %c0_i32_0 : i32, i32
  }
}

</mosaic_0001>

<llo_original>
// kernel: tpu_custom_call.1
$region0: #{tpu_custom_call.1}
  #allocation0 [shape = 'u32[]', space=smem, size = 0x4, offset = 0x4, fixed_abs, tag = 'smem constant byte address 0x4 - core index']
  #allocation1 [shape = 'u32[72,128]{1,0:T(1,128)}', space=vmem, size = 0x9000, scoped, tag = 'internal scratch']
  #allocation2 [shape = 'f32[1,128]{1,0:T(1,128)}', space=vmem, size = 0x200, scoped, tag = 'scratch operand']
  #allocation3 [shape = 'f32[1,128]{1,0:T(1,128)}', space=vmem, size = 0x200, scoped, tag = 'scratch operand']
  %s0 = inlined_call_operand.hbm [shape: bf16[512,128], index: 0, kind: input, shape index: {}]
  %s1 = inlined_call_operand.hbm [shape: bf16[128,128], index: 1, kind: input, shape index: {}]
  %s2 = inlined_call_operand.vmem [shape: f32[1,128], index: 2, kind: input, shape index: {}]
  %s3 = inlined_call_operand.vmem [shape: f32[1,128], index: 3, kind: input, shape index: {}]
  %s4 = inlined_call_operand.hbm [shape: bf16[512,128], index: 4, kind: output, shape index: {0}]
  %s5 = inlined_call_operand.hbm [shape: f32[2,128], index: 5, kind: output, shape index: {1}]
  %6 = xla_tuple %s4, %s5
  %s7 = sld [smem:[#allocation0]]
  $region50: #{tpu_custom_call.1} parent=0
    _
  %s9 = ssub.s32 1, %s7
  %s10 = scalar_select 0, %s9, %s7
  $region1: #{tpu_custom_call.1} parent=0
    #allocation4 [shape = 'u8[131072]{0}', space=vmem, size = 0x20000, scoped, tag = 'input window, operand 0, single buffered']
    #allocation5 [shape = 's32[1]{0}', space=sflag, size = 0x4, scoped, tag = 'scoped memory for tpu_custom_call.1']
    #allocation6 [shape = 's32[1]{0}', space=sflag, size = 0x4, scoped, tag = 'scoped memory for tpu_custom_call.1']
    #allocation7 [shape = 'u8[32768]{0}', space=vmem, size = 0x8000, scoped, tag = 'input window, operand 1, single buffered']
    #allocation8 [shape = 's32[1]{0}', space=sflag, size = 0x4, scoped, tag = 'scoped memory for tpu_custom_call.1']
    #allocation9 [shape = 'u8[131072]{0}', space=vmem, size = 0x20000, scoped, tag = 'output window, operand 0, single buffered']
    #allocation10 [shape = 'u8[1024]{0}', space=vmem, size = 0x400, scoped, tag = 'output window, operand 1, single buffered']
    #allocation11 [shape = 's32[1]{0}', space=sflag, size = 0x4, scoped, tag = 'scoped memory for tpu_custom_call.1']
    %11 = vsyncpa [#allocation5], 0
    %12 = vsyncpa [#allocation8], 0
    %13 = vsyncpa [#allocation6], 0
    %14 = vsyncpa [#allocation11], 0
    // Predicated region
    $region2: #{tpu_custom_call.1} parent=1 // pred_check
      _
    $region3: #{tpu_custom_call.1} parent=1 // pred_check_branch
      %16 = sbr.rel (0) target = $region5
    $region4: #{tpu_custom_call.1} parent=1 // pred_region
      %18 = vsyncadd [#allocation5], 0
      %s19 = sshll.u32 %s0, 4
      %s20 = int_to_ptr.hbm [resolvable:$true] %s19
      %s21 = sshll.u32 [#allocation4], 4
      %s22 = int_to_ptr.vmem [resolvable:$true] %s21
      %27 = dma.hbm_to_vmem [thread:$0]  %s20, 4096, %s22, [#allocation5], 64, 64, 4
    $region5: #{tpu_custom_call.1} parent=1 // pred_fallthru
      _
    // Predicated region
    $region6: #{tpu_custom_call.1} parent=1 // pred_check
      _
    $region7: #{tpu_custom_call.1} parent=1 // pred_check_branch
      %29 = sbr.rel (0) target = $region9
    $region8: #{tpu_custom_call.1} parent=1 // pred_region
      %31 = vsyncadd [#allocation8], 0
      %s32 = sshll.u32 %s1, 4
      %s33 = int_to_ptr.hbm [resolvable:$true] %s32
      %s34 = sshll.u32 [#allocation7], 4
      %s35 = int_to_ptr.vmem [resolvable:$true] %s34
      %40 = dma.hbm_to_vmem [thread:$0]  %s33, 1024, %s35, [#allocation8], 64, 64, 4
    $region9: #{tpu_custom_call.1} parent=1 // pred_fallthru
      _
    // Predicated region
    $region10: #{tpu_custom_call.1} parent=1 // pred_check
      _
    $region11: #{tpu_custom_call.1} parent=1 // pred_check_branch
      %42 = sbr.rel (0) target = $region13
    $region12: #{tpu_custom_call.1} parent=1 // pred_region
      _
    $region13: #{tpu_custom_call.1} parent=1 // pred_fallthru
      _
    // Predicated region
    $region14: #{tpu_custom_call.1} parent=1 // pred_check
      _
    $region15: #{tpu_custom_call.1} parent=1 // pred_check_branch
      %44 = sbr.rel (0) target = $region17
    $region16: #{tpu_custom_call.1} parent=1 // pred_region
      _
    $region17: #{tpu_custom_call.1} parent=1 // pred_fallthru
      _
    // Predicated region
    $region18: #{tpu_custom_call.1} parent=1 // pred_check
      _
    $region19: #{tpu_custom_call.1} parent=1 // pred_check_branch
      %46 = sbr.rel (0) target = $region21
    $region20: #{tpu_custom_call.1} parent=1 // pred_region
      %48 = dma.done [#allocation5], 4096
    $region21: #{tpu_custom_call.1} parent=1 // pred_fallthru
      _
    // Predicated region
    $region22: #{tpu_custom_call.1} parent=1 // pred_check
      _
    $region23: #{tpu_custom_call.1} parent=1 // pred_check_branch
      %50 = sbr.rel (0) target = $region25
    $region24: #{tpu_custom_call.1} parent=1 // pred_region
      %52 = dma.done [#allocation8], 1024
    $region25: #{tpu_custom_call.1} parent=1 // pred_fallthru
      _
    %p53 = scmp.eq.s32.totalorder 0, 0
    // Predicated region
    $region26: #{tpu_custom_call.1} parent=1 // pred_check
      %p54 = pneg %p53
    $region27: #{tpu_custom_call.1} parent=1 // pred_check_branch
      %56 = sbr.rel (%p54) target = $region29
    $region28: #{tpu_custom_call.1} parent=1 // pred_region
      %57 = vst [vmem:[#allocation2] sm:$0x1] 0.0
      %58 = vst [vmem:[#allocation3] sm:$0x1] 0.0
    $region29: #{tpu_custom_call.1} parent=1 // pred_fallthru
      _
    %v59 = vld [vmem:[#allocation4] sm:$0xf]
    %v60 = vld [vmem:[#allocation4 + $0x4] sm:$0xf]
    %v61 = vld [vmem:[#allocation4 + $0x8] sm:$0xf]
    %v62 = vld [vmem:[#allocation4 + $0xc] sm:$0xf]
    %v63 = vld [vmem:[#allocation4 + $0x10] sm:$0xf]
    %v64 = vld [vmem:[#allocation4 + $0x14] sm:$0xf]
    %v65 = vld [vmem:[#allocation4 + $0x18] sm:$0xf]
    %v66 = vld [vmem:[#allocation4 + $0x1c] sm:$0xf]
    %v67 = vld [vmem:[#allocation4 + $0x20] sm:$0xf]
    %v68 = vld [vmem:[#allocation4 + $0x24] sm:$0xf]
    %v69 = vld [vmem:[#allocation4 + $0x28] sm:$0xf]
    %v70 = vld [vmem:[#allocation4 + $0x2c] sm:$0xf]
    %v71 = vld [vmem:[#allocation4 + $0x30] sm:$0xf]
    %v72 = vld [vmem:[#allocation4 + $0x34] sm:$0xf]
    %v73 = vld [vmem:[#allocation4 + $0x38] sm:$0xf]
    %v74 = vld [vmem:[#allocation4 + $0x3c] sm:$0xf]
    %v75 = vld [vmem:[#allocation4 + $0x40] sm:$0xf]
    %v76 = vld [vmem:[#allocation4 + $0x44] sm:$0xf]
    %v77 = vld [vmem:[#allocation4 + $0x48] sm:$0xf]
    %v78 = vld [vmem:[#allocation4 + $0x4c] sm:$0xf]
    %v79 = vld [vmem:[#allocation4 + $0x50] sm:$0xf]
    %v80 = vld [vmem:[#allocation4 + $0x54] sm:$0xf]
    %v81 = vld [vmem:[#allocation4 + $0x58] sm:$0xf]
    %v82 = vld [vmem:[#allocation4 + $0x5c] sm:$0xf]
    %v83 = vld [vmem:[#allocation4 + $0x60] sm:$0xf]
    %v84 = vld [vmem:[#allocation4 + $0x64] sm:$0xf]
    %v85 = vld [vmem:[#allocation4 + $0x68] sm:$0xf]
    %v86 = vld [vmem:[#allocation4 + $0x6c] sm:$0xf]
    %v87 = vld [vmem:[#allocation4 + $0x70] sm:$0xf]
    %v88 = vld [vmem:[#allocation4 + $0x74] sm:$0xf]
    %v89 = vld [vmem:[#allocation4 + $0x78] sm:$0xf]
    %v90 = vld [vmem:[#allocation4 + $0x7c] sm:$0xf]
    %v91 = vld [vmem:[#allocation4 + $0x80] sm:$0xf]
    %v92 = vld [vmem:[#allocation4 + $0x84] sm:$0xf]
    %v93 = vld [vmem:[#allocation4 + $0x88] sm:$0xf]
    %v94 = vld [vmem:[#allocation4 + $0x8c] sm:$0xf]
    %v95 = vld [vmem:[#allocation4 + $0x90] sm:$0xf]
    %v96 = vld [vmem:[#allocation4 + $0x94] sm:$0xf]
    %v97 = vld [vmem:[#allocation4 + $0x98] sm:$0xf]
    %v98 = vld [vmem:[#allocation4 + $0x9c] sm:$0xf]
    %v99 = vld [vmem:[#allocation4 + $0xa0] sm:$0xf]
    %v100 = vld [vmem:[#allocation4 + $0xa4] sm:$0xf]
    %v101 = vld [vmem:[#allocation4 + $0xa8] sm:$0xf]
    %v102 = vld [vmem:[#allocation4 + $0xac] sm:$0xf]
    %v103 = vld [vmem:[#allocation4 + $0xb0] sm:$0xf]
    %v104 = vld [vmem:[#allocation4 + $0xb4] sm:$0xf]
    %v105 = vld [vmem:[#allocation4 + $0xb8] sm:$0xf]
    %v106 = vld [vmem:[#allocation4 + $0xbc] sm:$0xf]
    %v107 = vld [vmem:[#allocation4 + $0xc0] sm:$0xf]
    %v108 = vld [vmem:[#allocation4 + $0xc4] sm:$0xf]
    %v109 = vld [vmem:[#allocation4 + $0xc8] sm:$0xf]
    %v110 = vld [vmem:[#allocation4 + $0xcc] sm:$0xf]
    %v111 = vld [vmem:[#allocation4 + $0xd0] sm:$0xf]
    %v112 = vld [vmem:[#allocation4 + $0xd4] sm:$0xf]
    %v113 = vld [vmem:[#allocation4 + $0xd8] sm:$0xf]
    %v114 = vld [vmem:[#allocation4 + $0xdc] sm:$0xf]
    %v115 = vld [vmem:[#allocation4 + $0xe0] sm:$0xf]
    %v116 = vld [vmem:[#allocation4 + $0xe4] sm:$0xf]
    %v117 = vld [vmem:[#allocation4 + $0xe8] sm:$0xf]
    %v118 = vld [vmem:[#allocation4 + $0xec] sm:$0xf]
    %v119 = vld [vmem:[#allocation4 + $0xf0] sm:$0xf]
    %v120 = vld [vmem:[#allocation4 + $0xf4] sm:$0xf]
    %v121 = vld [vmem:[#allocation4 + $0xf8] sm:$0xf]
    %v122 = vld [vmem:[#allocation4 + $0xfc] sm:$0xf]
    %v123 = vld [vmem:[#allocation7] sm:$0xf]
    %v124 = vld [vmem:[#allocation7 + $0x4] sm:$0xf]
    %v125 = vld [vmem:[#allocation7 + $0x8] sm:$0xf]
    %v126 = vld [vmem:[#allocation7 + $0xc] sm:$0xf]
    %v127 = vld [vmem:[#allocation7 + $0x10] sm:$0xf]
    %v128 = vld [vmem:[#allocation7 + $0x14] sm:$0xf]
    %v129 = vld [vmem:[#allocation7 + $0x18] sm:$0xf]
    %v130 = vld [vmem:[#allocation7 + $0x1c] sm:$0xf]
    %v131 = vld [vmem:[#allocation7 + $0x20] sm:$0xf]
    %v132 = vld [vmem:[#allocation7 + $0x24] sm:$0xf]
    %v133 = vld [vmem:[#allocation7 + $0x28] sm:$0xf]
    %v134 = vld [vmem:[#allocation7 + $0x2c] sm:$0xf]
    %v135 = vld [vmem:[#allocation7 + $0x30] sm:$0xf]
    %v136 = vld [vmem:[#allocation7 + $0x34] sm:$0xf]
    %v137 = vld [vmem:[#allocation7 + $0x38] sm:$0xf]
    %v138 = vld [vmem:[#allocation7 + $0x3c] sm:$0xf]
    %v203 = vunpack.c.l.b16 %v59
    %v204 = vunpack.c.l.b16 %v60
    %v205 = vunpack.c.l.b16 %v61
    %v206 = vunpack.c.l.b16 %v62
    %v207 = vunpack.c.l.b16 %v63
    %v208 = vunpack.c.l.b16 %v64
    %v209 = vunpack.c.l.b16 %v65
    %v210 = vunpack.c.l.b16 %v66
    %v211 = vunpack.c.l.b16 %v67
    %v212 = vunpack.c.l.b16 %v68
    %v213 = vunpack.c.l.b16 %v69
    %v214 = vunpack.c.l.b16 %v70
    %v215 = vunpack.c.l.b16 %v71
    %v216 = vunpack.c.l.b16 %v72
    %v217 = vunpack.c.l.b16 %v73
    %v218 = vunpack.c.l.b16 %v74
    %v219 = vunpack.c.l.b16 %v75
    %v220 = vunpack.c.l.b16 %v76
    %v221 = vunpack.c.l.b16 %v77
    %v222 = vunpack.c.l.b16 %v78
    %v223 = vunpack.c.l.b16 %v79
    %v224 = vunpack.c.l.b16 %v80
    %v225 = vunpack.c.l.b16 %v81
    %v226 = vunpack.c.l.b16 %v82
    %v227 = vunpack.c.l.b16 %v83
    %v228 = vunpack.c.l.b16 %v84
    %v229 = vunpack.c.l.b16 %v85
    %v230 = vunpack.c.l.b16 %v86
    %v231 = vunpack.c.l.b16 %v87
    %v232 = vunpack.c.l.b16 %v88
    %v233 = vunpack.c.l.b16 %v89
    %v234 = vunpack.c.l.b16 %v90
    %v235 = vunpack.c.l.b16 %v91
    %v236 = vunpack.c.l.b16 %v92
    %v237 = vunpack.c.l.b16 %v93
    %v238 = vunpack.c.l.b16 %v94
    %v239 = vunpack.c.l.b16 %v95
    %v240 = vunpack.c.l.b16 %v96
    %v241 = vunpack.c.l.b16 %v97
    %v242 = vunpack.c.l.b16 %v98
    %v243 = vunpack.c.l.b16 %v99
    %v244 = vunpack.c.l.b16 %v100
    %v245 = vunpack.c.l.b16 %v101
    %v246 = vunpack.c.l.b16 %v102
    %v247 = vunpack.c.l.b16 %v103
    %v248 = vunpack.c.l.b16 %v104
    %v249 = vunpack.c.l.b16 %v105
    %v250 = vunpack.c.l.b16 %v106
    %v251 = vunpack.c.l.b16 %v107
    %v252 = vunpack.c.l.b16 %v108
    %v253 = vunpack.c.l.b16 %v109
    %v254 = vunpack.c.l.b16 %v110
    %v255 = vunpack.c.l.b16 %v111
    %v256 = vunpack.c.l.b16 %v112
    %v257 = vunpack.c.l.b16 %v113
    %v258 = vunpack.c.l.b16 %v114
    %v259 = vunpack.c.l.b16 %v115
    %v260 = vunpack.c.l.b16 %v116
    %v261 = vunpack.c.l.b16 %v117
    %v262 = vunpack.c.l.b16 %v118
    %v263 = vunpack.c.l.b16 %v119
    %v264 = vunpack.c.l.b16 %v120
    %v265 = vunpack.c.l.b16 %v121
    %v266 = vunpack.c.l.b16 %v122
    %v267 = vpack.c.b16 %v204, %v203
    %v268 = vpack.c.b16 %v206, %v205
    %v269 = vpack.c.b16 %v208, %v207
    %v270 = vpack.c.b16 %v210, %v209
    %v271 = vpack.c.b16 %v212, %v211
    %v272 = vpack.c.b16 %v214, %v213
    %v273 = vpack.c.b16 %v216, %v215
    %v274 = vpack.c.b16 %v218, %v217
    %v275 = vpack.c.b16 %v220, %v219
    %v276 = vpack.c.b16 %v222, %v221
    %v277 = vpack.c.b16 %v224, %v223
    %v278 = vpack.c.b16 %v226, %v225
    %v279 = vpack.c.b16 %v228, %v227
    %v280 = vpack.c.b16 %v230, %v229
    %v281 = vpack.c.b16 %v232, %v231
    %v282 = vpack.c.b16 %v234, %v233
    %v283 = vpack.c.b16 %v236, %v235
    %v284 = vpack.c.b16 %v238, %v237
    %v285 = vpack.c.b16 %v240, %v239
    %v286 = vpack.c.b16 %v242, %v241
    %v287 = vpack.c.b16 %v244, %v243
    %v288 = vpack.c.b16 %v246, %v245
    %v289 = vpack.c.b16 %v248, %v247
    %v290 = vpack.c.b16 %v250, %v249
    %v291 = vpack.c.b16 %v252, %v251
    %v292 = vpack.c.b16 %v254, %v253
    %v293 = vpack.c.b16 %v256, %v255
    %v294 = vpack.c.b16 %v258, %v257
    %v295 = vpack.c.b16 %v260, %v259
    %v296 = vpack.c.b16 %v262, %v261
    %v297 = vpack.c.b16 %v264, %v263
    %v298 = vpack.c.b16 %v266, %v265
    %v347 = vunpack.c.l.b16 %v123
    %v348 = vunpack.c.l.b16 %v124
    %v349 = vunpack.c.l.b16 %v125
    %v350 = vunpack.c.l.b16 %v126
    %v351 = vunpack.c.l.b16 %v127
    %v352 = vunpack.c.l.b16 %v128
    %v353 = vunpack.c.l.b16 %v129
    %v354 = vunpack.c.l.b16 %v130
    %v355 = vunpack.c.l.b16 %v131
    %v356 = vunpack.c.l.b16 %v132
    %v357 = vunpack.c.l.b16 %v133
    %v358 = vunpack.c.l.b16 %v134
    %v359 = vunpack.c.l.b16 %v135
    %v360 = vunpack.c.l.b16 %v136
    %v361 = vunpack.c.l.b16 %v137
    %v362 = vunpack.c.l.b16 %v138
    %v363 = vpack.c.b16 %v348, %v347
    %v364 = vpack.c.b16 %v350, %v349
    %v365 = vpack.c.b16 %v352, %v351
    %v366 = vpack.c.b16 %v354, %v353
    %v367 = vpack.c.b16 %v356, %v355
    %v368 = vpack.c.b16 %v358, %v357
    %v369 = vpack.c.b16 %v360, %v359
    %v370 = vpack.c.b16 %v362, %v361
    %379 = vmatpush.bf16.msra.mxu0 %v370
    %380 = vmatpush.bf16.msra.mxu0 %v369
    %381 = vmatpush.bf16.msra.mxu0 %v368
    %382 = vmatpush.bf16.msra.mxu0 %v367
    %383 = vmatpush.bf16.msra.mxu0 %v366
    %384 = vmatpush.bf16.msra.mxu0 %v365
    %385 = vmatpush.bf16.msra.mxu0 %v364
    %386 = vmatpush.bf16.msra.mxu0 %v363
    %387 = vmatmul.bf16.gmra.mxu0 %v267
    %v388 = vpop.f32.mrf.mxu0
    %v389 = vadd.f32 0.0, %v388
    %v390 = vpop.f32.mrf.mxu0
    %v391 = vadd.f32 0.0, %v390
    %392 = vmatmul.bf16.gmra.mxu0 %v268
    %v393 = vpop.f32.mrf.mxu0
    %v394 = vadd.f32 0.0, %v393
    %v395 = vpop.f32.mrf.mxu0
    %v396 = vadd.f32 0.0, %v395
    %397 = vmatmul.bf16.gmra.mxu0 %v269
    %v398 = vpop.f32.mrf.mxu0
    %v399 = vadd.f32 0.0, %v398
    %v400 = vpop.f32.mrf.mxu0
    %v401 = vadd.f32 0.0, %v400
    %402 = vmatmul.bf16.gmra.mxu0 %v270
    %v403 = vpop.f32.mrf.mxu0
    %v404 = vadd.f32 0.0, %v403
    %v405 = vpop.f32.mrf.mxu0
    %v406 = vadd.f32 0.0, %v405
    %407 = vmatmul.bf16.gmra.mxu0 %v271
    %v408 = vpop.f32.mrf.mxu0
    %v409 = vadd.f32 0.0, %v408
    %v410 = vpop.f32.mrf.mxu0
    %v411 = vadd.f32 0.0, %v410
    %412 = vmatmul.bf16.gmra.mxu0 %v272
    %v413 = vpop.f32.mrf.mxu0
    %v414 = vadd.f32 0.0, %v413
    %v415 = vpop.f32.mrf.mxu0
    %v416 = vadd.f32 0.0, %v415
    %417 = vmatmul.bf16.gmra.mxu0 %v273
    %v418 = vpop.f32.mrf.mxu0
    %v419 = vadd.f32 0.0, %v418
    %v420 = vpop.f32.mrf.mxu0
    %v421 = vadd.f32 0.0, %v420
    %422 = vmatmul.bf16.gmra.mxu0 %v274
    %v423 = vpop.f32.mrf.mxu0
    %v424 = vadd.f32 0.0, %v423
    %v425 = vpop.f32.mrf.mxu0
    %v426 = vadd.f32 0.0, %v425
    %427 = vmatmul.bf16.gmra.mxu0 %v275
    %v428 = vpop.f32.mrf.mxu0
    %v429 = vadd.f32 0.0, %v428
    %v430 = vpop.f32.mrf.mxu0
    %v431 = vadd.f32 0.0, %v430
    %432 = vmatmul.bf16.gmra.mxu0 %v276
    %v433 = vpop.f32.mrf.mxu0
    %v434 = vadd.f32 0.0, %v433
    %v435 = vpop.f32.mrf.mxu0
    %v436 = vadd.f32 0.0, %v435
    %437 = vmatmul.bf16.gmra.mxu0 %v277
    %v438 = vpop.f32.mrf.mxu0
    %v439 = vadd.f32 0.0, %v438
    %v440 = vpop.f32.mrf.mxu0
    %v441 = vadd.f32 0.0, %v440
    %442 = vmatmul.bf16.gmra.mxu0 %v278
    %v443 = vpop.f32.mrf.mxu0
    %v444 = vadd.f32 0.0, %v443
    %v445 = vpop.f32.mrf.mxu0
    %v446 = vadd.f32 0.0, %v445
    %447 = vmatmul.bf16.gmra.mxu0 %v279
    %v448 = vpop.f32.mrf.mxu0
    %v449 = vadd.f32 0.0, %v448
    %v450 = vpop.f32.mrf.mxu0
    %v451 = vadd.f32 0.0, %v450
    %452 = vmatmul.bf16.gmra.mxu0 %v280
    %v453 = vpop.f32.mrf.mxu0
    %v454 = vadd.f32 0.0, %v453
    %v455 = vpop.f32.mrf.mxu0
    %v456 = vadd.f32 0.0, %v455
    %457 = vmatmul.bf16.gmra.mxu0 %v281
    %v458 = vpop.f32.mrf.mxu0
    %v459 = vadd.f32 0.0, %v458
    %v460 = vpop.f32.mrf.mxu0
    %v461 = vadd.f32 0.0, %v460
    %462 = vmatmul.bf16.gmra.mxu0 %v282
    %v463 = vpop.f32.mrf.mxu0
    %v464 = vadd.f32 0.0, %v463
    %v465 = vpop.f32.mrf.mxu0
    %v466 = vadd.f32 0.0, %v465
    %467 = vmatmul.bf16.gmra.mxu0 %v283
    %v468 = vpop.f32.mrf.mxu0
    %v469 = vadd.f32 0.0, %v468
    %v470 = vpop.f32.mrf.mxu0
    %v471 = vadd.f32 0.0, %v470
    %472 = vmatmul.bf16.gmra.mxu0 %v284
    %v473 = vpop.f32.mrf.mxu0
    %v474 = vadd.f32 0.0, %v473
    %v475 = vpop.f32.mrf.mxu0
    %v476 = vadd.f32 0.0, %v475
    %477 = vmatmul.bf16.gmra.mxu0 %v285
    %v478 = vpop.f32.mrf.mxu0
    %v479 = vadd.f32 0.0, %v478
    %v480 = vpop.f32.mrf.mxu0
    %v481 = vadd.f32 0.0, %v480
    %482 = vmatmul.bf16.gmra.mxu0 %v286
    %v483 = vpop.f32.mrf.mxu0
    %v484 = vadd.f32 0.0, %v483
    %v485 = vpop.f32.mrf.mxu0
    %v486 = vadd.f32 0.0, %v485
    %487 = vmatmul.bf16.gmra.mxu0 %v287
    %v488 = vpop.f32.mrf.mxu0
    %v489 = vadd.f32 0.0, %v488
    %v490 = vpop.f32.mrf.mxu0
    %v491 = vadd.f32 0.0, %v490
    %492 = vmatmul.bf16.gmra.mxu0 %v288
    %v493 = vpop.f32.mrf.mxu0
    %v494 = vadd.f32 0.0, %v493
    %v495 = vpop.f32.mrf.mxu0
    %v496 = vadd.f32 0.0, %v495
    %497 = vmatmul.bf16.gmra.mxu0 %v289
    %v498 = vpop.f32.mrf.mxu0
    %v499 = vadd.f32 0.0, %v498
    %v500 = vpop.f32.mrf.mxu0
    %v501 = vadd.f32 0.0, %v500
    %502 = vmatmul.bf16.gmra.mxu0 %v290
    %v503 = vpop.f32.mrf.mxu0
    %v504 = vadd.f32 0.0, %v503
    %v505 = vpop.f32.mrf.mxu0
    %v506 = vadd.f32 0.0, %v505
    %507 = vmatmul.bf16.gmra.mxu0 %v291
    %v508 = vpop.f32.mrf.mxu0
    %v509 = vadd.f32 0.0, %v508
    %v510 = vpop.f32.mrf.mxu0
    %v511 = vadd.f32 0.0, %v510
    %512 = vmatmul.bf16.gmra.mxu0 %v292
    %v513 = vpop.f32.mrf.mxu0
    %v514 = vadd.f32 0.0, %v513
    %v515 = vpop.f32.mrf.mxu0
    %v516 = vadd.f32 0.0, %v515
    %517 = vmatmul.bf16.gmra.mxu0 %v293
    %v518 = vpop.f32.mrf.mxu0
    %v519 = vadd.f32 0.0, %v518
    %v520 = vpop.f32.mrf.mxu0
    %v521 = vadd.f32 0.0, %v520
    %522 = vmatmul.bf16.gmra.mxu0 %v294
    %v523 = vpop.f32.mrf.mxu0
    %v524 = vadd.f32 0.0, %v523
    %v525 = vpop.f32.mrf.mxu0
    %v526 = vadd.f32 0.0, %v525
    %527 = vmatmul.bf16.gmra.mxu0 %v295
    %v528 = vpop.f32.mrf.mxu0
    %v529 = vadd.f32 0.0, %v528
    %v530 = vpop.f32.mrf.mxu0
    %v531 = vadd.f32 0.0, %v530
    %532 = vmatmul.bf16.gmra.mxu0 %v296
    %v533 = vpop.f32.mrf.mxu0
    %v534 = vadd.f32 0.0, %v533
    %v535 = vpop.f32.mrf.mxu0
    %v536 = vadd.f32 0.0, %v535
    %537 = vmatmul.bf16.gmra.mxu0 %v297
    %v538 = vpop.f32.mrf.mxu0
    %v539 = vadd.f32 0.0, %v538
    %v540 = vpop.f32.mrf.mxu0
    %v541 = vadd.f32 0.0, %v540
    %542 = vmatmul.bf16.gmra.mxu0 %v298
    %v543 = vpop.f32.mrf.mxu0
    %v544 = vadd.f32 0.0, %v543
    %v545 = vpop.f32.mrf.mxu0
    %v546 = vadd.f32 0.0, %v545
    %547 = vdwg.mxu0
    %v548 = vld [vmem:[#allocation2] sm:$0x1]
    %v549 = vadd.f32 %v389, %v391
    %v550 = vadd.f32 %v549, %v394
    %v551 = vadd.f32 %v550, %v396
    %v552 = vadd.f32 %v551, %v399
    %v553 = vadd.f32 %v552, %v401
    %v554 = vadd.f32 %v553, %v404
    %v555 = vadd.f32 %v554, %v406
    %v556 = vadd.f32 %v555, %v409
    %v557 = vadd.f32 %v556, %v411
    %v558 = vadd.f32 %v557, %v414
    %v559 = vadd.f32 %v558, %v416
    %v560 = vadd.f32 %v559, %v419
    %v561 = vadd.f32 %v560, %v421
    %v562 = vadd.f32 %v561, %v424
    %v563 = vadd.f32 %v562, %v426
    %v564 = vadd.f32 %v563, %v429
    %v565 = vadd.f32 %v564, %v431
    %v566 = vadd.f32 %v565, %v434
    %v567 = vadd.f32 %v566, %v436
    %v568 = vadd.f32 %v567, %v439
    %v569 = vadd.f32 %v568, %v441
    %v570 = vadd.f32 %v569, %v444
    %v571 = vadd.f32 %v570, %v446
    %v572 = vadd.f32 %v571, %v449
    %v573 = vadd.f32 %v572, %v451
    %v574 = vadd.f32 %v573, %v454
    %v575 = vadd.f32 %v574, %v456
    %v576 = vadd.f32 %v575, %v459
    %v577 = vadd.f32 %v576, %v461
    %v578 = vadd.f32 %v577, %v464
    %v579 = vadd.f32 %v578, %v466
    %v580 = vadd.f32 %v579, %v469
    %v581 = vadd.f32 %v580, %v471
    %v582 = vadd.f32 %v581, %v474
    %v583 = vadd.f32 %v582, %v476
    %v584 = vadd.f32 %v583, %v479
    %v585 = vadd.f32 %v584, %v481
    %v586 = vadd.f32 %v585, %v484
    %v587 = vadd.f32 %v586, %v486
    %v588 = vadd.f32 %v587, %v489
    %v589 = vadd.f32 %v588, %v491
    %v590 = vadd.f32 %v589, %v494
    %v591 = vadd.f32 %v590, %v496
    %v592 = vadd.f32 %v591, %v499
    %v593 = vadd.f32 %v592, %v501
    %v594 = vadd.f32 %v593, %v504
    %v595 = vadd.f32 %v594, %v506
    %v596 = vadd.f32 %v595, %v509
    %v597 = vadd.f32 %v596, %v511
    %v598 = vadd.f32 %v597, %v514
    %v599 = vadd.f32 %v598, %v516
    %v600 = vadd.f32 %v599, %v519
    %v601 = vadd.f32 %v600, %v521
    %v602 = vadd.f32 %v601, %v524
    %v603 = vadd.f32 %v602, %v526
    %v604 = vadd.f32 %v603, %v529
    %v605 = vadd.f32 %v604, %v531
    %v606 = vadd.f32 %v605, %v534
    %v607 = vadd.f32 %v606, %v536
    %v608 = vadd.f32 %v607, %v539
    %v609 = vadd.f32 %v608, %v541
    %v610 = vadd.f32 %v609, %v544
    %v611 = vadd.f32 %v610, %v546
    %v612 = vrot.slane %v611, 4
    %v613 = vadd.f32 %v611, %v612
    %v614 = vrot.slane %v613, 2
    %v615 = vadd.f32 %v613, %v614
    %v616 = vrot.slane %v615, 1
    %v617 = vadd.f32 %v615, %v616
    %v618 = vadd.f32 %v548, %v617
    %619 = vst [vmem:[#allocation2] sm:$0x1] %v618
    %v620 = vld [vmem:[#allocation3] sm:$0x1]
    %v621 = vmul.f32 %v389, %v389
    %v622 = vmul.f32 %v391, %v391
    %v623 = vmul.f32 %v394, %v394
    %v624 = vmul.f32 %v396, %v396
    %v625 = vmul.f32 %v399, %v399
    %v626 = vmul.f32 %v401, %v401
    %v627 = vmul.f32 %v404, %v404
    %v628 = vmul.f32 %v406, %v406
    %v629 = vmul.f32 %v409, %v409
    %v630 = vmul.f32 %v411, %v411
    %v631 = vmul.f32 %v414, %v414
    %v632 = vmul.f32 %v416, %v416
    %v633 = vmul.f32 %v419, %v419
    %v634 = vmul.f32 %v421, %v421
    %v635 = vmul.f32 %v424, %v424
    %v636 = vmul.f32 %v426, %v426
    %v637 = vmul.f32 %v429, %v429
    %v638 = vmul.f32 %v431, %v431
    %v639 = vmul.f32 %v434, %v434
    %v640 = vmul.f32 %v436, %v436
    %v641 = vmul.f32 %v439, %v439
    %v642 = vmul.f32 %v441, %v441
    %v643 = vmul.f32 %v444, %v444
    %v644 = vmul.f32 %v446, %v446
    %v645 = vmul.f32 %v449, %v449
    %v646 = vmul.f32 %v451, %v451
    %v647 = vmul.f32 %v454, %v454
    %v648 = vmul.f32 %v456, %v456
    %v649 = vmul.f32 %v459, %v459
    %v650 = vmul.f32 %v461, %v461
    %v651 = vmul.f32 %v464, %v464
    %v652 = vmul.f32 %v466, %v466
    %v653 = vmul.f32 %v469, %v469
    %v654 = vmul.f32 %v471, %v471
    %v655 = vmul.f32 %v474, %v474
    %v656 = vmul.f32 %v476, %v476
    %v657 = vmul.f32 %v479, %v479
    %v658 = vmul.f32 %v481, %v481
    %v659 = vmul.f32 %v484, %v484
    %v660 = vmul.f32 %v486, %v486
    %v661 = vmul.f32 %v489, %v489
    %v662 = vmul.f32 %v491, %v491
    %v663 = vmul.f32 %v494, %v494
    %v664 = vmul.f32 %v496, %v496
    %v665 = vmul.f32 %v499, %v499
    %v666 = vmul.f32 %v501, %v501
    %v667 = vmul.f32 %v504, %v504
    %v668 = vmul.f32 %v506, %v506
    %v669 = vmul.f32 %v509, %v509
    %v670 = vmul.f32 %v511, %v511
    %v671 = vmul.f32 %v514, %v514
    %v672 = vmul.f32 %v516, %v516
    %v673 = vmul.f32 %v519, %v519
    %v674 = vmul.f32 %v521, %v521
    %v675 = vmul.f32 %v524, %v524
    %v676 = vmul.f32 %v526, %v526
    %v677 = vmul.f32 %v529, %v529
    %v678 = vmul.f32 %v531, %v531
    %v679 = vmul.f32 %v534, %v534
    %v680 = vmul.f32 %v536, %v536
    %v681 = vmul.f32 %v539, %v539
    %v682 = vmul.f32 %v541, %v541
    %v683 = vmul.f32 %v544, %v544
    %v684 = vmul.f32 %v546, %v546
    %v685 = vadd.f32 %v621, %v622
    %v686 = vadd.f32 %v685, %v623
    %v687 = vadd.f32 %v686, %v624
    %v688 = vadd.f32 %v687, %v625
    %v689 = vadd.f32 %v688, %v626
    %v690 = vadd.f32 %v689, %v627
    %v691 = vadd.f32 %v690, %v628
    %v692 = vadd.f32 %v691, %v629
    %v693 = vadd.f32 %v692, %v630
    %v694 = vadd.f32 %v693, %v631
    %v695 = vadd.f32 %v694, %v632
    %v696 = vadd.f32 %v695, %v633
    %v697 = vadd.f32 %v696, %v634
    %v698 = vadd.f32 %v697, %v635
    %v699 = vadd.f32 %v698, %v636
    %v700 = vadd.f32 %v699, %v637
    %v701 = vadd.f32 %v700, %v638
    %v702 = vadd.f32 %v701, %v639
    %v703 = vadd.f32 %v702, %v640
    %v704 = vadd.f32 %v703, %v641
    %v705 = vadd.f32 %v704, %v642
    %v706 = vadd.f32 %v705, %v643
    %v707 = vadd.f32 %v706, %v644
    %v708 = vadd.f32 %v707, %v645
    %v709 = vadd.f32 %v708, %v646
    %v710 = vadd.f32 %v709, %v647
    %v711 = vadd.f32 %v710, %v648
    %v712 = vadd.f32 %v711, %v649
    %v713 = vadd.f32 %v712, %v650
    %v714 = vadd.f32 %v713, %v651
    %v715 = vadd.f32 %v714, %v652
    %v716 = vadd.f32 %v715, %v653
    %v717 = vadd.f32 %v716, %v654
    %v718 = vadd.f32 %v717, %v655
    %v719 = vadd.f32 %v718, %v656
    %v720 = vadd.f32 %v719, %v657
    %v721 = vadd.f32 %v720, %v658
    %v722 = vadd.f32 %v721, %v659
    %v723 = vadd.f32 %v722, %v660
    %v724 = vadd.f32 %v723, %v661
    %v725 = vadd.f32 %v724, %v662
    %v726 = vadd.f32 %v725, %v663
    %v727 = vadd.f32 %v726, %v664
    %v728 = vadd.f32 %v727, %v665
    %v729 = vadd.f32 %v728, %v666
    %v730 = vadd.f32 %v729, %v667
    %v731 = vadd.f32 %v730, %v668
    %v732 = vadd.f32 %v731, %v669
    %v733 = vadd.f32 %v732, %v670
    %v734 = vadd.f32 %v733, %v671
    %v735 = vadd.f32 %v734, %v672
    %v736 = vadd.f32 %v735, %v673
    %v737 = vadd.f32 %v736, %v674
    %v738 = vadd.f32 %v737, %v675
    %v739 = vadd.f32 %v738, %v676
    %v740 = vadd.f32 %v739, %v677
    %v741 = vadd.f32 %v740, %v678
    %v742 = vadd.f32 %v741, %v679
    %v743 = vadd.f32 %v742, %v680
    %v744 = vadd.f32 %v743, %v681
    %v745 = vadd.f32 %v744, %v682
    %v746 = vadd.f32 %v745, %v683
    %v747 = vadd.f32 %v746, %v684
    %v748 = vrot.slane %v747, 4
    %v749 = vadd.f32 %v747, %v748
    %v750 = vrot.slane %v749, 2
    %v751 = vadd.f32 %v749, %v750
    %v752 = vrot.slane %v751, 1
    %v753 = vadd.f32 %v751, %v752
    %v754 = vadd.f32 %v620, %v753
    %755 = vst [vmem:[#allocation3] sm:$0x1] %v754
    %v756 = vpack.c.bf16 %v389, %v389
    %v757 = vpack.c.bf16 %v391, %v391
    %v758 = vpack.c.bf16 %v394, %v394
    %v759 = vpack.c.bf16 %v396, %v396
    %v760 = vpack.c.bf16 %v399, %v399
    %v761 = vpack.c.bf16 %v401, %v401
    %v762 = vpack.c.bf16 %v404, %v404
    %v763 = vpack.c.bf16 %v406, %v406
    %v764 = vpack.c.bf16 %v409, %v409
    %v765 = vpack.c.bf16 %v411, %v411
    %v766 = vpack.c.bf16 %v414, %v414
    %v767 = vpack.c.bf16 %v416, %v416
    %v768 = vpack.c.bf16 %v419, %v419
    %v769 = vpack.c.bf16 %v421, %v421
    %v770 = vpack.c.bf16 %v424, %v424
    %v771 = vpack.c.bf16 %v426, %v426
    %v772 = vpack.c.bf16 %v429, %v429
    %v773 = vpack.c.bf16 %v431, %v431
    %v774 = vpack.c.bf16 %v434, %v434
    %v775 = vpack.c.bf16 %v436, %v436
    %v776 = vpack.c.bf16 %v439, %v439
    %v777 = vpack.c.bf16 %v441, %v441
    %v778 = vpack.c.bf16 %v444, %v444
    %v779 = vpack.c.bf16 %v446, %v446
    %v780 = vpack.c.bf16 %v449, %v449
    %v781 = vpack.c.bf16 %v451, %v451
    %v782 = vpack.c.bf16 %v454, %v454
    %v783 = vpack.c.bf16 %v456, %v456
    %v784 = vpack.c.bf16 %v459, %v459
    %v785 = vpack.c.bf16 %v461, %v461
    %v786 = vpack.c.bf16 %v464, %v464
    %v787 = vpack.c.bf16 %v466, %v466
    %v788 = vpack.c.bf16 %v469, %v469
    %v789 = vpack.c.bf16 %v471, %v471
    %v790 = vpack.c.bf16 %v474, %v474
    %v791 = vpack.c.bf16 %v476, %v476
    %v792 = vpack.c.bf16 %v479, %v479
    %v793 = vpack.c.bf16 %v481, %v481
    %v794 = vpack.c.bf16 %v484, %v484
    %v795 = vpack.c.bf16 %v486, %v486
    %v796 = vpack.c.bf16 %v489, %v489
    %v797 = vpack.c.bf16 %v491, %v491
    %v798 = vpack.c.bf16 %v494, %v494
    %v799 = vpack.c.bf16 %v496, %v496
    %v800 = vpack.c.bf16 %v499, %v499
    %v801 = vpack.c.bf16 %v501, %v501
    %v802 = vpack.c.bf16 %v504, %v504
    %v803 = vpack.c.bf16 %v506, %v506
    %v804 = vpack.c.bf16 %v509, %v509
    %v805 = vpack.c.bf16 %v511, %v511
    %v806 = vpack.c.bf16 %v514, %v514
    %v807 = vpack.c.bf16 %v516, %v516
    %v808 = vpack.c.bf16 %v519, %v519
    %v809 = vpack.c.bf16 %v521, %v521
    %v810 = vpack.c.bf16 %v524, %v524
    %v811 = vpack.c.bf16 %v526, %v526
    %v812 = vpack.c.bf16 %v529, %v529
    %v813 = vpack.c.bf16 %v531, %v531
    %v814 = vpack.c.bf16 %v534, %v534
    %v815 = vpack.c.bf16 %v536, %v536
    %v816 = vpack.c.bf16 %v539, %v539
    %v817 = vpack.c.bf16 %v541, %v541
    %v818 = vpack.c.bf16 %v544, %v544
    %v819 = vpack.c.bf16 %v546, %v546
    %820 = vst [vmem:[#allocation9] sm:$0xf] %v756
    %821 = vst [vmem:[#allocation9 + $0x4] sm:$0xf] %v757
    %822 = vst [vmem:[#allocation9 + $0x8] sm:$0xf] %v758
    %823 = vst [vmem:[#allocation9 + $0xc] sm:$0xf] %v759
    %824 = vst [vmem:[#allocation9 + $0x10] sm:$0xf] %v760
    %825 = vst [vmem:[#allocation9 + $0x14] sm:$0xf] %v761
    %826 = vst [vmem:[#allocation9 + $0x18] sm:$0xf] %v762
    %827 = vst [vmem:[#allocation9 + $0x1c] sm:$0xf] %v763
    %828 = vst [vmem:[#allocation9 + $0x20] sm:$0xf] %v764
    %829 = vst [vmem:[#allocation9 + $0x24] sm:$0xf] %v765
    %830 = vst [vmem:[#allocation9 + $0x28] sm:$0xf] %v766
    %831 = vst [vmem:[#allocation9 + $0x2c] sm:$0xf] %v767
    %832 = vst [vmem:[#allocation9 + $0x30] sm:$0xf] %v768
    %833 = vst [vmem:[#allocation9 + $0x34] sm:$0xf] %v769
    %834 = vst [vmem:[#allocation9 + $0x38] sm:$0xf] %v770
    %835 = vst [vmem:[#allocation9 + $0x3c] sm:$0xf] %v771
    %836 = vst [vmem:[#allocation9 + $0x40] sm:$0xf] %v772
    %837 = vst [vmem:[#allocation9 + $0x44] sm:$0xf] %v773
    %838 = vst [vmem:[#allocation9 + $0x48] sm:$0xf] %v774
    %839 = vst [vmem:[#allocation9 + $0x4c] sm:$0xf] %v775
    %840 = vst [vmem:[#allocation9 + $0x50] sm:$0xf] %v776
    %841 = vst [vmem:[#allocation9 + $0x54] sm:$0xf] %v777
    %842 = vst [vmem:[#allocation9 + $0x58] sm:$0xf] %v778
    %843 = vst [vmem:[#allocation9 + $0x5c] sm:$0xf] %v779
    %844 = vst [vmem:[#allocation9 + $0x60] sm:$0xf] %v780
    %845 = vst [vmem:[#allocation9 + $0x64] sm:$0xf] %v781
    %846 = vst [vmem:[#allocation9 + $0x68] sm:$0xf] %v782
    %847 = vst [vmem:[#allocation9 + $0x6c] sm:$0xf] %v783
    %848 = vst [vmem:[#allocation9 + $0x70] sm:$0xf] %v784
    %849 = vst [vmem:[#allocation9 + $0x74] sm:$0xf] %v785
    %850 = vst [vmem:[#allocation9 + $0x78] sm:$0xf] %v786
    %851 = vst [vmem:[#allocation9 + $0x7c] sm:$0xf] %v787
    %852 = vst [vmem:[#allocation9 + $0x80] sm:$0xf] %v788
    %853 = vst [vmem:[#allocation9 + $0x84] sm:$0xf] %v789
    %854 = vst [vmem:[#allocation9 + $0x88] sm:$0xf] %v790
    %855 = vst [vmem:[#allocation9 + $0x8c] sm:$0xf] %v791
    %856 = vst [vmem:[#allocation9 + $0x90] sm:$0xf] %v792
    %857 = vst [vmem:[#allocation9 + $0x94] sm:$0xf] %v793
    %858 = vst [vmem:[#allocation9 + $0x98] sm:$0xf] %v794
    %859 = vst [vmem:[#allocation9 + $0x9c] sm:$0xf] %v795
    %860 = vst [vmem:[#allocation9 + $0xa0] sm:$0xf] %v796
    %861 = vst [vmem:[#allocation9 + $0xa4] sm:$0xf] %v797
    %862 = vst [vmem:[#allocation9 + $0xa8] sm:$0xf] %v798
    %863 = vst [vmem:[#allocation9 + $0xac] sm:$0xf] %v799
    %864 = vst [vmem:[#allocation9 + $0xb0] sm:$0xf] %v800
    %865 = vst [vmem:[#allocation9 + $0xb4] sm:$0xf] %v801
    %866 = vst [vmem:[#allocation9 + $0xb8] sm:$0xf] %v802
    %867 = vst [vmem:[#allocation9 + $0xbc] sm:$0xf] %v803
    %868 = vst [vmem:[#allocation9 + $0xc0] sm:$0xf] %v804
    %869 = vst [vmem:[#allocation9 + $0xc4] sm:$0xf] %v805
    %870 = vst [vmem:[#allocation9 + $0xc8] sm:$0xf] %v806
    %871 = vst [vmem:[#allocation9 + $0xcc] sm:$0xf] %v807
    %872 = vst [vmem:[#allocation9 + $0xd0] sm:$0xf] %v808
    %873 = vst [vmem:[#allocation9 + $0xd4] sm:$0xf] %v809
    %874 = vst [vmem:[#allocation9 + $0xd8] sm:$0xf] %v810
    %875 = vst [vmem:[#allocation9 + $0xdc] sm:$0xf] %v811
    %876 = vst [vmem:[#allocation9 + $0xe0] sm:$0xf] %v812
    %877 = vst [vmem:[#allocation9 + $0xe4] sm:$0xf] %v813
    %878 = vst [vmem:[#allocation9 + $0xe8] sm:$0xf] %v814
    %879 = vst [vmem:[#allocation9 + $0xec] sm:$0xf] %v815
    %880 = vst [vmem:[#allocation9 + $0xf0] sm:$0xf] %v816
    %881 = vst [vmem:[#allocation9 + $0xf4] sm:$0xf] %v817
    %882 = vst [vmem:[#allocation9 + $0xf8] sm:$0xf] %v818
    %883 = vst [vmem:[#allocation9 + $0xfc] sm:$0xf] %v819
    // Predicated region
    $region30: #{tpu_custom_call.1} parent=1 // pred_check
      %p884 = pneg %p53
    $region31: #{tpu_custom_call.1} parent=1 // pred_check_branch
      %886 = sbr.rel (%p884) target = $region33
    $region32: #{tpu_custom_call.1} parent=1 // pred_region
      %v887 = vld [vmem:[#allocation2] sm:$0x1]
      %v888 = vmul.f32 %v887, 0.001953125
      %v889 = vld [vmem:[#allocation3] sm:$0x1]
      %v890 = vmul.f32 %v889, 0.001953125
      %v891 = vmul.f32 %v888, %v888
      %v892 = vsub.f32 %v890, %v891
      %v893 = vmax.f32 %v892, 0.0
      %v894 = vld [vmem:[%s2] sm:$0x1]
      %v895 = vadd.f32 %v893, 1e-05
      %v896 = vrsqrt.pop %v895
      %v897 = vmul.f32 %v896, %v895
      %v898 = vmul.f32 %v897, %v896
      %v899 = vmul.f32 0.5, %v898
      %v900 = vsub.f32 1.5, %v899
      %v901 = vmul.f32 %v896, %v900
      %vm902 = vweird.f32 %v895
      %vm903 = vweird.f32 %v896
      %vm904 = vmor %vm902, %vm903
      %v905 = vsel %vm904, %v896, %v901
      %v906 = vmul.f32 %v894, %v905
      %v907 = vld [vmem:[%s3] sm:$0x1]
      %v908 = vmul.f32 %v888, %v906
      %v909 = vsub.f32 %v907, %v908
      %910 = vst [vmem:[#allocation10] sm:$0x1] %v906
      %911 = vst [vmem:[#allocation10 + $0x1] sm:$0x1] %v909
    $region33: #{tpu_custom_call.1} parent=1 // pred_fallthru
      _
    // Predicated region
    $region34: #{tpu_custom_call.1} parent=1 // pred_check
      _
    $region35: #{tpu_custom_call.1} parent=1 // pred_check_branch
      %913 = sbr.rel (0) target = $region37
    $region36: #{tpu_custom_call.1} parent=1 // pred_region
      %915 = vsyncadd [#allocation6], 0
      %s916 = sshll.u32 [#allocation9], 4
      %s917 = int_to_ptr.vmem [resolvable:$true] %s916
      %s918 = sshll.u32 %s4, 4
      %s919 = int_to_ptr.hbm [resolvable:$true] %s918
      %924 = dma.vmem_to_hbm [thread:$0]  %s917, 4096, %s919, [#allocation6], 64, 64, 4
    $region37: #{tpu_custom_call.1} parent=1 // pred_fallthru
      _
    // Predicated region
    $region38: #{tpu_custom_call.1} parent=1 // pred_check
      _
    $region39: #{tpu_custom_call.1} parent=1 // pred_check_branch
      %926 = sbr.rel (0) target = $region41
    $region40: #{tpu_custom_call.1} parent=1 // pred_region
      %928 = vsyncadd [#allocation11], 0
      %s930 = sshll.u32 [#allocation10], 4
      %s931 = int_to_ptr.vmem [resolvable:$true] %s930
      %s932 = sshll.u32 %s5, 4
      %s933 = int_to_ptr.hbm [resolvable:$true] %s932
      %935 = dma.vmem_to_hbm [thread:$0]  %s931, 32, %s933, [#allocation11]
    $region41: #{tpu_custom_call.1} parent=1 // pred_fallthru
      _
    // Predicated region
    $region42: #{tpu_custom_call.1} parent=1 // pred_check
      _
    $region43: #{tpu_custom_call.1} parent=1 // pred_check_branch
      %937 = sbr.rel (0) target = $region45
    $region44: #{tpu_custom_call.1} parent=1 // pred_region
      %939 = dma.done [#allocation6], 4096
    $region45: #{tpu_custom_call.1} parent=1 // pred_fallthru
      _
    // Predicated region
    $region46: #{tpu_custom_call.1} parent=1 // pred_check
      _
    $region47: #{tpu_custom_call.1} parent=1 // pred_check_branch
      %941 = sbr.rel (0) target = $region49
    $region48: #{tpu_custom_call.1} parent=1 // pred_region
      %943 = dma.done [#allocation11], 32
    $region49: #{tpu_custom_call.1} parent=1 // pred_fallthru
      _
    %944 = vsyncpa [#allocation5], 1
    %945 = vsyncpa [#allocation8], 1
    %946 = vsyncpa [#allocation6], 1
    %947 = vsyncpa [#allocation11], 1

</llo_original>
